<compile_context>
chip_gen: v5e
topology: v5e:2x2
jax: 0.10.0
libtpu: 0.0.40
codegen_flags: <defaults>
</compile_context>

<pallas_src>
import functools

import jax
import jax.numpy as jnp
from jax.experimental import pallas as pl
from jax.experimental.pallas import tpu as pltpu

LANE = 128


# --------------------------------------------------------------------------
# Kernel
# --------------------------------------------------------------------------
def euler_mlp_kernel(dt_ref, u_ref, w1_ref, b1_ref, w2_ref, b2_ref, out_ref,
                     *, num_steps, unroll):
    """One packed batch tile: out = Euler^{num_steps}(u, dt)."""
    u = u_ref[...]
    if u.dtype != jnp.float32:
        u = u.astype(jnp.float32)
    w1 = w1_ref[...]
    b1 = b1_ref[...]
    w2 = w2_ref[...]
    b2 = b2_ref[...]
    dt = dt_ref[0, 0]

    def step(_, u_cur):
        h = jnp.tanh(
            jnp.dot(u_cur, w1, preferred_element_type=jnp.float32) + b1)
        f = jnp.dot(h, w2, preferred_element_type=jnp.float32) + b2
        return u_cur + dt * f

    if num_steps == 1:
        u_next = step(0, u)
    else:
        # Fused multi-step integration: u stays on-chip across steps.
        u_next = jax.lax.fori_loop(0, num_steps, step, u, unroll=unroll)

    out_ref[...] = u_next.astype(out_ref.dtype)


# --------------------------------------------------------------------------
# One-time parameter packing (hoisted out of the per-step call path)
# --------------------------------------------------------------------------
def pack_mlp_params(w1, b1, w2, b2):
    """Pack the MLP weights into lane-dense block-diagonal form.

    pack = 128 // H rows of u are packed into one 128-lane row, and
    W1/W2 become block-diagonal so the packed matmuls are exactly equivalent
    to `pack` independent per-row MLP evaluations.
    """
    H, HID = w1.shape
    assert w2.shape == (HID, H)
    b1 = b1.reshape(1, HID)
    b2 = b2.reshape(1, H)

    pack = LANE // H if (H < LANE and LANE % H == 0) else 1
    if pack > 1:
        eye = jnp.eye(pack, dtype=w1.dtype)
        w1p = jnp.kron(eye, w1)            # [pack*H, pack*HID], block-diagonal
        w2p = jnp.kron(eye, w2)            # [pack*HID, pack*H], block-diagonal
        b1p = jnp.tile(b1, (1, pack))      # [1, pack*HID]
        b2p = jnp.tile(b2, (1, pack))      # [1, pack*H]
    else:
        w1p, b1p, w2p, b2p = w1, b1, w2, b2

    # Exact zero-pad of the (packed) hidden dim to a multiple of 128 lanes:
    # tanh(0 + 0) = 0 and the padded W2 rows are zero, so results are exact.
    kh = w1p.shape[1]
    kh_pad = -(-kh // LANE) * LANE
    if kh_pad != kh:
        w1p = jnp.pad(w1p, ((0, 0), (0, kh_pad - kh)))
        b1p = jnp.pad(b1p, ((0, 0), (0, kh_pad - kh)))
        w2p = jnp.pad(w2p, ((0, kh_pad - kh), (0, 0)))

    return {"w1": w1p, "b1": b1p, "w2": w2p, "b2": b2p, "pack": pack, "h": H}


def _choose_tile_p(bp, max_tile=4096):
    """Packed-row tile size (rows are 128 lanes * 4 B = 512 B each).

    max_tile=4096 -> 2 MiB per tile; with double-buffered in+out (~8 MiB) plus
    VMEM-resident weights this stays under v5e's 16 MiB scoped-VMEM default
    and well under v7x's 64 MiB physical VMEM.
    """
    if bp <= 8:
        return 8
    if bp <= 2 * max_tile:
        # Split into exactly 2 tiles: even grid >= 2 keeps both v7x TCs busy.
        half = -(-bp // 2)
        return -(-half // 8) * 8           # round up to sublane multiple (8)
    return max_tile


# --------------------------------------------------------------------------
# Wrapper
# --------------------------------------------------------------------------
def euler_method(u, dt, packed, *, num_steps=1):
    """u: [B, H] f32.  Returns `num_steps` Euler steps of u' = f(u)."""
    B, H = u.shape
    assert H == packed["h"]
    pack = packed["pack"]
    w1p, b1p, w2p, b2p = packed["w1"], packed["b1"], packed["w2"], packed["b2"]
    hrow = w1p.shape[0]                     # = pack * H  (lane-dense row width)
    kh = w1p.shape[1]                       # padded packed hidden dim

    # Pack batch rows into 128-lane rows; zero-pad ragged batches to a tile
    # multiple (padded rows compute garbage that is sliced off, never NaN/inf
    # issues since the MLP is finite on zeros).
    bp = -(-B // pack)
    tile_p = _choose_tile_p(bp)
    bp_pad = -(-bp // tile_p) * tile_p
    b_pad = bp_pad * pack
    if b_pad != B:
        u = jnp.pad(u, ((0, b_pad - B), (0, 0)))
    u_packed = u.reshape(bp_pad, hrow)

    grid = (bp_pad // tile_p,)
    dt_arr = jnp.asarray(dt, dtype=jnp.float32).reshape(1, 1)
    unroll = max(1, min(int(num_steps), 4))
    kernel = functools.partial(euler_mlp_kernel,
                               num_steps=num_steps, unroll=unroll)

    out_packed = pl.pallas_call(
        kernel,
        out_shape=jax.ShapeDtypeStruct((bp_pad, hrow), u.dtype),
        grid=grid,
        in_specs=[
            pl.BlockSpec(memory_space=pltpu.MemorySpace.SMEM),   # dt scalar
            pl.BlockSpec((tile_p, hrow), lambda i: (i, 0)),      # u tile (pipelined)
            pl.BlockSpec((hrow, kh), lambda i: (0, 0)),          # W1 (VMEM-resident)
            pl.BlockSpec((1, kh), lambda i: (0, 0)),             # b1
            pl.BlockSpec((kh, hrow), lambda i: (0, 0)),          # W2
            pl.BlockSpec((1, hrow), lambda i: (0, 0)),           # b2
        ],
        out_specs=pl.BlockSpec((tile_p, hrow), lambda i: (i, 0)),
        compiler_params=pltpu.CompilerParams(
            dimension_semantics=("parallel",),   # shard batch tiles across TCs
        ),
    )(dt_arr, u_packed, w1p, b1p, w2p, b2p)

    return out_packed.reshape(b_pad, H)[:B]


def reference(u, dt, w1, b1, w2, b2):
    h = jnp.tanh(u @ w1 + b1)
    f = h @ w2 + b2
    return u + dt * f


if __name__ == "__main__":
    B, H, HID = 1024, 32, 64   # small model dims; packed grid has 2 tiles
    key = jax.random.PRNGKey(0)
    k_u, k_w1, k_b1, k_w2, k_b2 = jax.random.split(key, 5)

    u = jax.random.normal(k_u, (B, H), dtype=jnp.float32)
    # Deterministic synthetic "model" parameters (no checkpoint load).
    w1 = jax.random.normal(k_w1, (H, HID), dtype=jnp.float32) * 0.1
    b1 = jax.random.normal(k_b1, (1, HID), dtype=jnp.float32) * 0.1
    w2 = jax.random.normal(k_w2, (HID, H), dtype=jnp.float32) * 0.1
    b2 = jax.random.normal(k_b2, (1, H), dtype=jnp.float32) * 0.1
    dt = 0.01

    # One-time packing (hoisted out of the per-step call path).
    packed = jax.tree_util.tree_map(
        lambda x: x, pack_mlp_params(w1, b1, w2, b2))

    # Single Euler step: exactly Euler_Method.forward(u, dt).
    out = jax.block_until_ready(euler_method(u, dt, packed))
    ref = reference(u, dt, w1, b1, w2, b2)
    assert out.shape == (B, H)
    assert jnp.allclose(out, ref, atol=1e-5, rtol=1e-5)

    # Fused multi-step integration (one kernel launch, u resident on-chip).
    n_steps = 4
    out_n = jax.block_until_ready(
        euler_method(u, dt, packed, num_steps=n_steps))
    ref_n = u
    for _ in range(n_steps):
        ref_n = reference(ref_n, dt, w1, b1, w2, b2)
    assert jnp.allclose(out_n, ref_n, atol=1e-5, rtol=1e-5)

    # Ragged-batch path (zero-pad to tile multiple, slice back).
    u_ragged = u[:1000]
    out_r = jax.block_until_ready(euler_method(u_ragged, dt, packed))
    ref_r = reference(u_ragged, dt, w1, b1, w2, b2)
    assert out_r.shape == (1000, H)
    assert jnp.allclose(out_r, ref_r, atol=1e-5, rtol=1e-5)

    print("KERNEL_OK")
</pallas_src>

<mosaic_0001>
module attributes {stable_mosaic.version = 11 : i64} {
  func.func @euler_mlp_kernel(%arg0: i32, %arg1: memref<1x1xf32, #tpu.memory_space<smem>>, %arg2: memref<128x128xf32, #tpu.memory_space<vmem>>, %arg3: memref<128x256xf32, #tpu.memory_space<vmem>>, %arg4: memref<1x256xf32, #tpu.memory_space<vmem>>, %arg5: memref<256x128xf32, #tpu.memory_space<vmem>>, %arg6: memref<1x128xf32, #tpu.memory_space<vmem>>, %arg7: memref<128x128xf32, #tpu.memory_space<vmem>>) attributes {dimension_semantics = [#tpu.dimension_semantics<parallel>], iteration_bounds = array<i64: 2>, scalar_prefetch = 0 : i64, scratch_operands = 0 : i64, tpu.core_type = #tpu.core_type<tc>, window_params = [{transform_indices = @transform_0, window_bounds = array<i64: 1, 1>}, {transform_indices = @transform_1, window_bounds = array<i64: 128, 128>}, {pipeline_mode = #tpu.pipeline_mode<synchronous>, transform_indices = @transform_2, window_bounds = array<i64: 128, 256>}, {pipeline_mode = #tpu.pipeline_mode<synchronous>, transform_indices = @transform_3, window_bounds = array<i64: 1, 256>}, {pipeline_mode = #tpu.pipeline_mode<synchronous>, transform_indices = @transform_4, window_bounds = array<i64: 256, 128>}, {pipeline_mode = #tpu.pipeline_mode<synchronous>, transform_indices = @transform_5, window_bounds = array<i64: 1, 128>}, {transform_indices = @transform_6, window_bounds = array<i64: 128, 128>}]} {
    %c0 = arith.constant 0 : index
    %c0_0 = arith.constant 0 : index
    %0 = vector.load %arg2[%c0, %c0_0] : memref<128x128xf32, #tpu.memory_space<vmem>>, vector<128x128xf32>
    %c0_1 = arith.constant 0 : index
    %c0_2 = arith.constant 0 : index
    %1 = vector.load %arg3[%c0_1, %c0_2] : memref<128x256xf32, #tpu.memory_space<vmem>>, vector<128x256xf32>
    %c0_3 = arith.constant 0 : index
    %c0_4 = arith.constant 0 : index
    %2 = vector.load %arg4[%c0_3, %c0_4] : memref<1x256xf32, #tpu.memory_space<vmem>>, vector<1x256xf32>
    %c0_5 = arith.constant 0 : index
    %c0_6 = arith.constant 0 : index
    %3 = vector.load %arg5[%c0_5, %c0_6] : memref<256x128xf32, #tpu.memory_space<vmem>>, vector<256x128xf32>
    %c0_7 = arith.constant 0 : index
    %c0_8 = arith.constant 0 : index
    %4 = vector.load %arg6[%c0_7, %c0_8] : memref<1x128xf32, #tpu.memory_space<vmem>>, vector<1x128xf32>
    %c0_9 = arith.constant 0 : index
    %c0_10 = arith.constant 0 : index
    %5 = memref.load %arg1[%c0_9, %c0_10] : memref<1x1xf32, #tpu.memory_space<smem>>
    %cst = arith.constant dense<0.000000e+00> : vector<128x256xf32>
    %6 = tpu.matmul %0, %1, %cst {dimension_numbers = #tpu.dot_dimension_numbers<[1], [0], [0], [1], [0, 0, 1, 1], [], []>} : vector<128x128xf32>, vector<128x256xf32>, vector<128x256xf32> -> vector<128x256xf32>
    %7 = vector.broadcast %2 : vector<1x256xf32> to vector<128x256xf32>
    %8 = arith.addf %6, %7 : vector<128x256xf32>
    %9 = math.tanh %8 : vector<128x256xf32>
    %cst_11 = arith.constant dense<0.000000e+00> : vector<128x128xf32>
    %10 = tpu.matmul %9, %3, %cst_11 {dimension_numbers = #tpu.dot_dimension_numbers<[1], [0], [0], [1], [0, 0, 1, 1], [], []>} : vector<128x256xf32>, vector<256x128xf32>, vector<128x128xf32> -> vector<128x128xf32>
    %11 = vector.broadcast %4 : vector<1x128xf32> to vector<128x128xf32>
    %12 = arith.addf %10, %11 : vector<128x128xf32>
    %13 = vector.broadcast %5 : f32 to vector<128x128xf32>
    %14 = arith.mulf %13, %12 : vector<128x128xf32>
    %15 = arith.addf %0, %14 : vector<128x128xf32>
    %c0_12 = arith.constant 0 : index
    %c0_13 = arith.constant 0 : index
    %16 = vector.load %arg7[%c0_12, %c0_13] : memref<128x128xf32, #tpu.memory_space<vmem>>, vector<128x128xf32>
    tpu.vector_store %arg7[%c0_12, %c0_13], %15 {strides = array<i32>} : memref<128x128xf32, #tpu.memory_space<vmem>>, vector<128x128xf32>,
    return
  }
  func.func @transform_0(%arg0: i32) -> (i32, i32) {
    %c0_i32 = arith.constant 0 : i32
    %c0_i32_0 = arith.constant 0 : i32
    %c0_i32_1 = arith.constant 0 : i32
    return %c0_i32, %c0_i32_0 : i32, i32
  }
  func.func @transform_1(%arg0: i32) -> (i32, i32) {
    %c0_i32 = arith.constant 0 : i32
    %c0_i32_0 = arith.constant 0 : i32
    return %arg0, %c0_i32 : i32, i32
  }
  func.func @transform_2(%arg0: i32) -> (i32, i32) {
    %c0_i32 = arith.constant 0 : i32
    %c0_i32_0 = arith.constant 0 : i32
    %c0_i32_1 = arith.constant 0 : i32
    return %c0_i32, %c0_i32_0 : i32, i32
  }
  func.func @transform_3(%arg0: i32) -> (i32, i32) {
    %c0_i32 = arith.constant 0 : i32
    %c0_i32_0 = arith.constant 0 : i32
    %c0_i32_1 = arith.constant 0 : i32
    return %c0_i32, %c0_i32_0 : i32, i32
  }
  func.func @transform_4(%arg0: i32) -> (i32, i32) {
    %c0_i32 = arith.constant 0 : i32
    %c0_i32_0 = arith.constant 0 : i32
    %c0_i32_1 = arith.constant 0 : i32
    return %c0_i32, %c0_i32_0 : i32, i32
  }
  func.func @transform_5(%arg0: i32) -> (i32, i32) {
    %c0_i32 = arith.constant 0 : i32
    %c0_i32_0 = arith.constant 0 : i32
    %c0_i32_1 = arith.constant 0 : i32
    return %c0_i32, %c0_i32_0 : i32, i32
  }
  func.func @transform_6(%arg0: i32) -> (i32, i32) {
    %c0_i32 = arith.constant 0 : i32
    %c0_i32_0 = arith.constant 0 : i32
    return %arg0, %c0_i32 : i32, i32
  }
}

</mosaic_0001>

<llo_original>
// kernel: tpu_custom_call.1
$region0: #{tpu_custom_call.1}
  #allocation0 [shape = 'u32[]', space=smem, size = 0x4, offset = 0x4, fixed_abs, tag = 'smem constant byte address 0x4 - core index']
  #allocation1 [shape = 'u32[72,128]{1,0:T(1,128)}', space=vmem, size = 0x9000, scoped, tag = 'internal scratch']
  #allocation2 [shape = 'f32[1,1]{1,0:T(1,128)S(6)}', space=smem, size = 0x200, scoped, tag = 'scoped memory for tpu_custom_call.1']
  %s0 = inlined_call_operand.<no memory space> [shape: f32[1,1], index: 0, kind: input, shape index: {}]
  %s1 = inlined_call_operand.hbm [shape: f32[256,128], index: 1, kind: input, shape index: {}]
  %s2 = inlined_call_operand.hbm [shape: f32[128,256], index: 2, kind: input, shape index: {}]
  %s3 = inlined_call_operand.vmem [shape: f32[1,256], index: 3, kind: input, shape index: {}]
  %s4 = inlined_call_operand.hbm [shape: f32[256,128], index: 4, kind: input, shape index: {}]
  %s5 = inlined_call_operand.vmem [shape: f32[1,128], index: 5, kind: input, shape index: {}]
  %s6 = inlined_call_operand.hbm [shape: f32[256,128], index: 6, kind: output, shape index: {}]
  %s7 = sld [smem:[#allocation0]]
  $region69: #{tpu_custom_call.1} parent=0
    _
  %s9 = ssub.s32 1, %s7
  %s10 = scalar_select 0, %s9, %s7
  %11 = sst [smem:[#allocation2]] %s0
  $region1: #{tpu_custom_call.1} parent=0
    #allocation3 [shape = 'u8[131072]{0}', space=vmem, size = 0x20000, scoped, tag = 'input window, operand 1']
    #allocation4 [shape = 's32[2]{0}', space=sflag, size = 0x8, scoped, tag = 'scoped memory for tpu_custom_call.1']
    #allocation5 [shape = 's32[2]{0}', space=sflag, size = 0x8, scoped, tag = 'scoped memory for tpu_custom_call.1']
    #allocation6 [shape = 'u8[131072]{0}', space=vmem, size = 0x20000, scoped, tag = 'input window, operand 2, single buffered']
    #allocation7 [shape = 's32[1]{0}', space=sflag, size = 0x4, scoped, tag = 'scoped memory for tpu_custom_call.1']
    #allocation8 [shape = 'u8[131072]{0}', space=vmem, size = 0x20000, scoped, tag = 'input window, operand 4, single buffered']
    #allocation9 [shape = 'u8[131072]{0}', space=vmem, size = 0x20000, scoped, tag = 'output window, operand 0']
    %12 = vsyncpa [#allocation4], 0
    %s13 = scalar_lea.sflag [#allocation4], 1
    %14 = vsyncpa %s13, 0
    %15 = vsyncpa [#allocation7], 0
    %16 = vsyncpa [#allocation5], 0
    %s17 = scalar_lea.sflag [#allocation5], 1
    %18 = vsyncpa %s17, 0
    loop: start=0, step=1, limit=4
    $region2: #{tpu_custom_call.1} parent=1 // loop_pre_header
      _
    $region3: #{tpu_custom_call.1} parent=1 // loop_header
      %s20 = sphi 0, %s24
      %p21 = scmp.ge.s32.totalorder %s20, 4
      %s28 = sphi 0, %s28
      %s30 = sphi 0, %s28
      %s31 = sphi 0, %s30
      %s45 = sphi 0, %s31
      %s51 = sphi 0, %s53
      %s54 = sphi 0, %s51
      %s55 = sphi 0, %s54
      %s71 = sphi 0, %s55
      %s75 = sphi 0, %s75
      %s77 = sphi 0, %s75
      %s78 = sphi 0, %s77
      %s92 = sphi 0, %s78
      %s96 = sphi 0, %s96
      %s98 = sphi 0, %s96
      %s99 = sphi 0, %s98
      %s113 = sphi 0, %s99
      %s117 = sphi 0, %s117
      %s119 = sphi 0, %s117
      %s120 = sphi 0, %s119
      %s134 = sphi 0, %s120
      %s138 = sphi 0, %s138
      %s140 = sphi 0, %s138
      %s141 = sphi 0, %s140
      %s155 = sphi 0, %s141
      %s161 = sphi 0, %s163
      %s164 = sphi 0, %s161
      %s165 = sphi 0, %s164
      %s181 = sphi 0, %s165
    $region4: #{tpu_custom_call.1} parent=1 // loop_header_branch
      %23 = sbr.rel (%p21) target = $region8
    $region5: #{tpu_custom_call.1} parent=1 // loop_body
      %s25 = ssub.s32 %s20, 1
      %s26 = ssub.s32 %s20, 2
      %s27 = sadd.s32 %s20, 1
      %s29 = sadd.s32 %s28, 1
      %p32 = scmp.eq.s32.totalorder %s20, 1
      %p33 = scmp.ne.s32.totalorder %s28, %s30
      %p34 = scmp.eq.s32.totalorder %s20, 0
      %p35 = por %p33, %p34
      %p36 = scmp.ne.s32.totalorder %s28, %s30
      %p37 = scmp.eq.s32.totalorder %s25, 1
      %p38 = por %p36, %p37
      %p39 = scmp.ne.s32.totalorder %s30, %s31
      %p40 = scmp.eq.s32.totalorder %s25, 0
      %p41 = por %p39, %p40
      %p42 = scmp.ne.s32.totalorder %s30, %s31
      %p43 = scmp.eq.s32.totalorder %s26, 1
      %p44 = por %p42, %p43
      %p46 = scmp.ne.s32.totalorder %s31, %s45
      %p47 = scmp.eq.s32.totalorder %s26, 0
      %p48 = por %p46, %p47
      %s49 = ssub.s32 %s20, %s27
      %p50 = scmp.eq.s32.totalorder %s49, 0
      %s52 = sadd.s32 %s51, 1
      %s53 = scalar_select %p50, %s51, %s52
      %p56 = pneg %p50
      %p57 = scmp.eq.s32.totalorder %s20, 1
      %p58 = por %p56, %p57
      %p59 = scmp.ne.s32.totalorder %s51, %s54
      %p60 = scmp.eq.s32.totalorder %s20, 0
      %p61 = por %p59, %p60
      %p62 = scmp.ne.s32.totalorder %s51, %s54
      %p63 = scmp.eq.s32.totalorder %s25, 1
      %p64 = por %p62, %p63
      %p65 = scmp.ne.s32.totalorder %s54, %s55
      %p66 = scmp.eq.s32.totalorder %s25, 0
      %p67 = por %p65, %p66
      %p68 = scmp.ne.s32.totalorder %s54, %s55
      %p69 = scmp.eq.s32.totalorder %s26, 1
      %p70 = por %p68, %p69
      %p72 = scmp.ne.s32.totalorder %s55, %s71
      %p73 = scmp.eq.s32.totalorder %s26, 0
      %p74 = por %p72, %p73
      %s76 = sadd.s32 %s75, 1
      %p79 = scmp.eq.s32.totalorder %s20, 1
      %p80 = scmp.ne.s32.totalorder %s75, %s77
      %p81 = scmp.eq.s32.totalorder %s20, 0
      %p82 = por %p80, %p81
      %p83 = scmp.ne.s32.totalorder %s75, %s77
      %p84 = scmp.eq.s32.totalorder %s25, 1
      %p85 = por %p83, %p84
      %p86 = scmp.ne.s32.totalorder %s77, %s78
      %p87 = scmp.eq.s32.totalorder %s25, 0
      %p88 = por %p86, %p87
      %p89 = scmp.ne.s32.totalorder %s77, %s78
      %p90 = scmp.eq.s32.totalorder %s26, 1
      %p91 = por %p89, %p90
      %p93 = scmp.ne.s32.totalorder %s78, %s92
      %p94 = scmp.eq.s32.totalorder %s26, 0
      %p95 = por %p93, %p94
      %s97 = sadd.s32 %s96, 1
      %p100 = scmp.eq.s32.totalorder %s20, 1
      %p101 = scmp.ne.s32.totalorder %s96, %s98
      %p102 = scmp.eq.s32.totalorder %s20, 0
      %p103 = por %p101, %p102
      %p104 = scmp.ne.s32.totalorder %s96, %s98
      %p105 = scmp.eq.s32.totalorder %s25, 1
      %p106 = por %p104, %p105
      %p107 = scmp.ne.s32.totalorder %s98, %s99
      %p108 = scmp.eq.s32.totalorder %s25, 0
      %p109 = por %p107, %p108
      %p110 = scmp.ne.s32.totalorder %s98, %s99
      %p111 = scmp.eq.s32.totalorder %s26, 1
      %p112 = por %p110, %p111
      %p114 = scmp.ne.s32.totalorder %s99, %s113
      %p115 = scmp.eq.s32.totalorder %s26, 0
      %p116 = por %p114, %p115
      %s118 = sadd.s32 %s117, 1
      %p121 = scmp.eq.s32.totalorder %s20, 1
      %p122 = scmp.ne.s32.totalorder %s117, %s119
      %p123 = scmp.eq.s32.totalorder %s20, 0
      %p124 = por %p122, %p123
      %p125 = scmp.ne.s32.totalorder %s117, %s119
      %p126 = scmp.eq.s32.totalorder %s25, 1
      %p127 = por %p125, %p126
      %p128 = scmp.ne.s32.totalorder %s119, %s120
      %p129 = scmp.eq.s32.totalorder %s25, 0
      %p130 = por %p128, %p129
      %p131 = scmp.ne.s32.totalorder %s119, %s120
      %p132 = scmp.eq.s32.totalorder %s26, 1
      %p133 = por %p131, %p132
      %p135 = scmp.ne.s32.totalorder %s120, %s134
      %p136 = scmp.eq.s32.totalorder %s26, 0
      %p137 = por %p135, %p136
      %s139 = sadd.s32 %s138, 1
      %p142 = scmp.eq.s32.totalorder %s20, 1
      %p143 = scmp.ne.s32.totalorder %s138, %s140
      %p144 = scmp.eq.s32.totalorder %s20, 0
      %p145 = por %p143, %p144
      %p146 = scmp.ne.s32.totalorder %s138, %s140
      %p147 = scmp.eq.s32.totalorder %s25, 1
      %p148 = por %p146, %p147
      %p149 = scmp.ne.s32.totalorder %s140, %s141
      %p150 = scmp.eq.s32.totalorder %s25, 0
      %p151 = por %p149, %p150
      %p152 = scmp.ne.s32.totalorder %s140, %s141
      %p153 = scmp.eq.s32.totalorder %s26, 1
      %p154 = por %p152, %p153
      %p156 = scmp.ne.s32.totalorder %s141, %s155
      %p157 = scmp.eq.s32.totalorder %s26, 0
      %p158 = por %p156, %p157
      %s159 = ssub.s32 %s20, %s27
      %p160 = scmp.eq.s32.totalorder %s159, 0
      %s162 = sadd.s32 %s161, 1
      %s163 = scalar_select %p160, %s161, %s162
      %p166 = pneg %p160
      %p167 = scmp.eq.s32.totalorder %s20, 1
      %p168 = por %p166, %p167
      %p169 = scmp.ne.s32.totalorder %s161, %s164
      %p170 = scmp.eq.s32.totalorder %s20, 0
      %p171 = por %p169, %p170
      %p172 = scmp.ne.s32.totalorder %s161, %s164
      %p173 = scmp.eq.s32.totalorder %s25, 1
      %p174 = por %p172, %p173
      %p175 = scmp.ne.s32.totalorder %s164, %s165
      %p176 = scmp.eq.s32.totalorder %s25, 0
      %p177 = por %p175, %p176
      %p178 = scmp.ne.s32.totalorder %s164, %s165
      %p179 = scmp.eq.s32.totalorder %s26, 1
      %p180 = por %p178, %p179
      %p182 = scmp.ne.s32.totalorder %s165, %s181
      %p183 = scmp.eq.s32.totalorder %s26, 0
      %p184 = por %p182, %p183
      %p185 = scmp.le.s32.totalorder 1, %s20
      %p186 = scmp.lt.s32.totalorder %s20, 3
      %p187 = pnand %p185, %p186
      %p188 = pneg %p187
      // Predicated region
      $region9: #{tpu_custom_call.1} parent=5 // pred_check
        _
      $region10: #{tpu_custom_call.1} parent=5 // pred_check_branch
        %190 = sbr.rel (%p187) target = $region12
      $region11: #{tpu_custom_call.1} parent=5 // pred_region
        %s191 = ssub.s32 %s20, 1
        // Predicated region
        $region13: #{tpu_custom_call.1} parent=11 // pred_check
          %p192 = pneg %p41
        $region14: #{tpu_custom_call.1} parent=11 // pred_check_branch
          %194 = sbr.rel (%p192) target = $region16
        $region15: #{tpu_custom_call.1} parent=11 // pred_region
          _
        $region16: #{tpu_custom_call.1} parent=11 // pred_fallthru
          _
        // Predicated region
        $region17: #{tpu_custom_call.1} parent=11 // pred_check
          %p195 = pneg %p88
        $region18: #{tpu_custom_call.1} parent=11 // pred_check_branch
          %197 = sbr.rel (%p195) target = $region20
        $region19: #{tpu_custom_call.1} parent=11 // pred_region
          %199 = vsyncadd [#allocation7], 0
          %s200 = sshll.u32 %s2, 4
          %s201 = int_to_ptr.hbm [resolvable:$true] %s200
          %s202 = sshll.u32 [#allocation6], 4
          %s203 = int_to_ptr.vmem [resolvable:$true] %s202
          %208 = dma.hbm_to_vmem [thread:$0]  %s201, 4096, %s203, [#allocation7], 256, 256, 16
        $region20: #{tpu_custom_call.1} parent=11 // pred_fallthru
          _
        // Predicated region
        $region21: #{tpu_custom_call.1} parent=11 // pred_check
          %p209 = pneg %p109
        $region22: #{tpu_custom_call.1} parent=11 // pred_check_branch
          %211 = sbr.rel (%p209) target = $region24
        $region23: #{tpu_custom_call.1} parent=11 // pred_region
          _
        $region24: #{tpu_custom_call.1} parent=11 // pred_fallthru
          _
        // Predicated region
        $region25: #{tpu_custom_call.1} parent=11 // pred_check
          %p212 = pneg %p130
        $region26: #{tpu_custom_call.1} parent=11 // pred_check_branch
          %214 = sbr.rel (%p212) target = $region28
        $region27: #{tpu_custom_call.1} parent=11 // pred_region
          %216 = vsyncadd [#allocation7], 0
          %s217 = sshll.u32 %s4, 4
          %s218 = int_to_ptr.hbm [resolvable:$true] %s217
          %s219 = sshll.u32 [#allocation8], 4
          %s220 = int_to_ptr.vmem [resolvable:$true] %s219
          %225 = dma.hbm_to_vmem [thread:$0]  %s218, 4096, %s220, [#allocation7], 128, 128, 8
        $region28: #{tpu_custom_call.1} parent=11 // pred_fallthru
          _
        // Predicated region
        $region29: #{tpu_custom_call.1} parent=11 // pred_check
          %p226 = pneg %p151
        $region30: #{tpu_custom_call.1} parent=11 // pred_check_branch
          %228 = sbr.rel (%p226) target = $region32
        $region31: #{tpu_custom_call.1} parent=11 // pred_region
          _
        $region32: #{tpu_custom_call.1} parent=11 // pred_fallthru
          _
      $region12: #{tpu_custom_call.1} parent=5 // pred_fallthru
        _
      %p229 = scmp.lt.s32.totalorder %s20, 2
      // Predicated region
      $region33: #{tpu_custom_call.1} parent=5 // pred_check
        %p230 = pneg %p229
      $region34: #{tpu_custom_call.1} parent=5 // pred_check_branch
        %232 = sbr.rel (%p230) target = $region36
      $region35: #{tpu_custom_call.1} parent=5 // pred_region
        // Predicated region
        $region37: #{tpu_custom_call.1} parent=35 // pred_check
          %p233 = pneg %p61
        $region38: #{tpu_custom_call.1} parent=35 // pred_check_branch
          %235 = sbr.rel (%p233) target = $region40
        $region39: #{tpu_custom_call.1} parent=35 // pred_region
          %s236 = sand.u32 %s51, 1
          %s237 = scalar_lea.sflag [#allocation4], %s236
          %s238 = sand.u32 %s51, 1
          %s239 = smul.addr %s238, 128
          %s240 = scalar_lea.vmem [#allocation3], %s239
          %s241 = smul.u32 16, %s20
          %243 = vsyncadd %s237, 0
          %s244 = smul.addr %s241, 8
          %s245 = scalar_lea.hbm %s1, %s244
          %s246 = sshll.u32 %s245, 4
          %s247 = int_to_ptr.hbm [resolvable:$true] %s246
          %s248 = sshll.u32 %s240, 4
          %s249 = int_to_ptr.vmem [resolvable:$true] %s248
          %254 = dma.hbm_to_vmem [thread:$0]  %s247, 2048, %s249, %s237, 128, 128, 8
        $region40: #{tpu_custom_call.1} parent=35 // pred_fallthru
          _
      $region36: #{tpu_custom_call.1} parent=5 // pred_fallthru
        _
      %p255 = scmp.le.s32.totalorder 1, %s20
      %p256 = scmp.lt.s32.totalorder %s20, 3
      %p257 = pnand %p255, %p256
      %p258 = pneg %p257
      // Predicated region
      $region41: #{tpu_custom_call.1} parent=5 // pred_check
        _
      $region42: #{tpu_custom_call.1} parent=5 // pred_check_branch
        %260 = sbr.rel (%p257) target = $region44
      $region43: #{tpu_custom_call.1} parent=5 // pred_region
        %s261 = ssub.s32 %s20, 1
        %s262 = sand.u32 %s54, 1
        %s263 = scalar_lea.sflag [#allocation4], %s262
        %s264 = sand.u32 %s54, 1
        %s265 = smul.addr %s264, 128
        %s266 = scalar_lea.vmem [#allocation3], %s265
        // Predicated region
        $region45: #{tpu_custom_call.1} parent=43 // pred_check
          %p267 = pneg %p67
        $region46: #{tpu_custom_call.1} parent=43 // pred_check_branch
          %269 = sbr.rel (%p267) target = $region48
        $region47: #{tpu_custom_call.1} parent=43 // pred_region
          %271 = dma.done %s263, 2048
        $region48: #{tpu_custom_call.1} parent=43 // pred_fallthru
          _
        // Predicated region
        $region49: #{tpu_custom_call.1} parent=43 // pred_check
          %p272 = pneg %p88
        $region50: #{tpu_custom_call.1} parent=43 // pred_check_branch
          %274 = sbr.rel (%p272) target = $region52
        $region51: #{tpu_custom_call.1} parent=43 // pred_region
          %276 = dma.done [#allocation7], 4096
        $region52: #{tpu_custom_call.1} parent=43 // pred_fallthru
          _
        // Predicated region
        $region53: #{tpu_custom_call.1} parent=43 // pred_check
          %p277 = pneg %p130
        $region54: #{tpu_custom_call.1} parent=43 // pred_check_branch
          %279 = sbr.rel (%p277) target = $region56
        $region55: #{tpu_custom_call.1} parent=43 // pred_region
          %281 = dma.done [#allocation7], 4096
        $region56: #{tpu_custom_call.1} parent=43 // pred_fallthru
          _
        %p282 = pneg %p41
        %p283 = pneg %p38
        %s284 = sand.u32 %s54, 1
        %s285 = scalar_lea.sflag [#allocation4], %s284
        %s286 = sand.u32 %s54, 1
        %s287 = smul.addr %s286, 128
        %s288 = scalar_lea.vmem [#allocation3], %s287
        %p289 = pneg %p67
        %p290 = pneg %p64
        %p291 = pneg %p88
        %p292 = pneg %p85
        %p293 = pneg %p109
        %p294 = pneg %p106
        %p295 = pneg %p130
        %p296 = pneg %p127
        %p297 = pneg %p151
        %p298 = pneg %p148
        %p299 = pneg %p177
        %p300 = pneg %p174
        %s301 = sand.u32 %s164, 1
        %s302 = scalar_lea.sflag [#allocation5], %s301
        %s303 = sand.u32 %s164, 1
        %s304 = smul.addr %s303, 128
        %s305 = scalar_lea.vmem [#allocation9], %s304
        %s306 = smul.u32 16, %s25
        %s307 = smul.u32 16, %s25
        %v308 = vld [vmem:[%s266] sm:$0xff]
        %v309 = vld [vmem:[%s266 + $0x8] sm:$0xff]
        %v310 = vld [vmem:[%s266 + $0x10] sm:$0xff]
        %v311 = vld [vmem:[%s266 + $0x18] sm:$0xff]
        %v312 = vld [vmem:[%s266 + $0x20] sm:$0xff]
        %v313 = vld [vmem:[%s266 + $0x28] sm:$0xff]
        %v314 = vld [vmem:[%s266 + $0x30] sm:$0xff]
        %v315 = vld [vmem:[%s266 + $0x38] sm:$0xff]
        %v316 = vld [vmem:[%s266 + $0x40] sm:$0xff]
        %v317 = vld [vmem:[%s266 + $0x48] sm:$0xff]
        %v318 = vld [vmem:[%s266 + $0x50] sm:$0xff]
        %v319 = vld [vmem:[%s266 + $0x58] sm:$0xff]
        %v320 = vld [vmem:[%s266 + $0x60] sm:$0xff]
        %v321 = vld [vmem:[%s266 + $0x68] sm:$0xff]
        %v322 = vld [vmem:[%s266 + $0x70] sm:$0xff]
        %v323 = vld [vmem:[%s266 + $0x78] sm:$0xff]
        %v324 = vld [vmem:[#allocation6] sm:$0xff]
        %v325 = vld [vmem:[#allocation6 + $0x8] sm:$0xff]
        %v326 = vld [vmem:[#allocation6 + $0x10] sm:$0xff]
        %v327 = vld [vmem:[#allocation6 + $0x18] sm:$0xff]
        %v328 = vld [vmem:[#allocation6 + $0x20] sm:$0xff]
        %v329 = vld [vmem:[#allocation6 + $0x28] sm:$0xff]
        %v330 = vld [vmem:[#allocation6 + $0x30] sm:$0xff]
        %v331 = vld [vmem:[#allocation6 + $0x38] sm:$0xff]
        %v332 = vld [vmem:[#allocation6 + $0x40] sm:$0xff]
        %v333 = vld [vmem:[#allocation6 + $0x48] sm:$0xff]
        %v334 = vld [vmem:[#allocation6 + $0x50] sm:$0xff]
        %v335 = vld [vmem:[#allocation6 + $0x58] sm:$0xff]
        %v336 = vld [vmem:[#allocation6 + $0x60] sm:$0xff]
        %v337 = vld [vmem:[#allocation6 + $0x68] sm:$0xff]
        %v338 = vld [vmem:[#allocation6 + $0x70] sm:$0xff]
        %v339 = vld [vmem:[#allocation6 + $0x78] sm:$0xff]
        %v340 = vld [vmem:[#allocation6 + $0x80] sm:$0xff]
        %v341 = vld [vmem:[#allocation6 + $0x88] sm:$0xff]
        %v342 = vld [vmem:[#allocation6 + $0x90] sm:$0xff]
        %v343 = vld [vmem:[#allocation6 + $0x98] sm:$0xff]
        %v344 = vld [vmem:[#allocation6 + $0xa0] sm:$0xff]
        %v345 = vld [vmem:[#allocation6 + $0xa8] sm:$0xff]
        %v346 = vld [vmem:[#allocation6 + $0xb0] sm:$0xff]
        %v347 = vld [vmem:[#allocation6 + $0xb8] sm:$0xff]
        %v348 = vld [vmem:[#allocation6 + $0xc0] sm:$0xff]
        %v349 = vld [vmem:[#allocation6 + $0xc8] sm:$0xff]
        %v350 = vld [vmem:[#allocation6 + $0xd0] sm:$0xff]
        %v351 = vld [vmem:[#allocation6 + $0xd8] sm:$0xff]
        %v352 = vld [vmem:[#allocation6 + $0xe0] sm:$0xff]
        %v353 = vld [vmem:[#allocation6 + $0xe8] sm:$0xff]
        %v354 = vld [vmem:[#allocation6 + $0xf0] sm:$0xff]
        %v355 = vld [vmem:[#allocation6 + $0xf8] sm:$0xff]
        %v356 = vld [vmem:[%s3] sm:$0x3]
        %v357 = vld [vmem:[#allocation8] sm:$0xff]
        %v358 = vld [vmem:[#allocation8 + $0x8] sm:$0xff]
        %v359 = vld [vmem:[#allocation8 + $0x10] sm:$0xff]
        %v360 = vld [vmem:[#allocation8 + $0x18] sm:$0xff]
        %v361 = vld [vmem:[#allocation8 + $0x20] sm:$0xff]
        %v362 = vld [vmem:[#allocation8 + $0x28] sm:$0xff]
        %v363 = vld [vmem:[#allocation8 + $0x30] sm:$0xff]
        %v364 = vld [vmem:[#allocation8 + $0x38] sm:$0xff]
        %v365 = vld [vmem:[#allocation8 + $0x40] sm:$0xff]
        %v366 = vld [vmem:[#allocation8 + $0x48] sm:$0xff]
        %v367 = vld [vmem:[#allocation8 + $0x50] sm:$0xff]
        %v368 = vld [vmem:[#allocation8 + $0x58] sm:$0xff]
        %v369 = vld [vmem:[#allocation8 + $0x60] sm:$0xff]
        %v370 = vld [vmem:[#allocation8 + $0x68] sm:$0xff]
        %v371 = vld [vmem:[#allocation8 + $0x70] sm:$0xff]
        %v372 = vld [vmem:[#allocation8 + $0x78] sm:$0xff]
        %v373 = vld [vmem:[#allocation8 + $0x80] sm:$0xff]
        %v374 = vld [vmem:[#allocation8 + $0x88] sm:$0xff]
        %v375 = vld [vmem:[#allocation8 + $0x90] sm:$0xff]
        %v376 = vld [vmem:[#allocation8 + $0x98] sm:$0xff]
        %v377 = vld [vmem:[#allocation8 + $0xa0] sm:$0xff]
        %v378 = vld [vmem:[#allocation8 + $0xa8] sm:$0xff]
        %v379 = vld [vmem:[#allocation8 + $0xb0] sm:$0xff]
        %v380 = vld [vmem:[#allocation8 + $0xb8] sm:$0xff]
        %v381 = vld [vmem:[#allocation8 + $0xc0] sm:$0xff]
        %v382 = vld [vmem:[#allocation8 + $0xc8] sm:$0xff]
        %v383 = vld [vmem:[#allocation8 + $0xd0] sm:$0xff]
        %v384 = vld [vmem:[#allocation8 + $0xd8] sm:$0xff]
        %v385 = vld [vmem:[#allocation8 + $0xe0] sm:$0xff]
        %v386 = vld [vmem:[#allocation8 + $0xe8] sm:$0xff]
        %v387 = vld [vmem:[#allocation8 + $0xf0] sm:$0xff]
        %v388 = vld [vmem:[#allocation8 + $0xf8] sm:$0xff]
        %v389 = vld [vmem:[%s5] sm:$0x1]
        %s390 = sld [smem:[#allocation2]]
        %v392 = vperm.slane %v356, 0
        %v393 = vperm.slane %v356, 1
        %396 = vmatpush.msra.mxu0 %v354
        %397 = vmatpush.msra.mxu0 %v352
        %398 = vmatpush.msra.mxu0 %v350
        %399 = vmatpush.msra.mxu0 %v348
        %400 = vmatpush.msra.mxu0 %v346
        %401 = vmatpush.msra.mxu0 %v344
        %402 = vmatpush.msra.mxu0 %v342
        %403 = vmatpush.msra.mxu0 %v340
        %404 = vmatpush.msra.mxu0 %v338
        %405 = vmatpush.msra.mxu0 %v336
        %406 = vmatpush.msra.mxu0 %v334
        %407 = vmatpush.msra.mxu0 %v332
        %408 = vmatpush.msra.mxu0 %v330
        %409 = vmatpush.msra.mxu0 %v328
        %410 = vmatpush.msra.mxu0 %v326
        %411 = vmatpush.msra.mxu0 %v324
        %412 = vmatmul.f32.gmra.mxu0 %v308
        %v413 = vpop.f32.mrf.mxu0
        %v414 = vadd.f32 %v392, %v413
        %415 = vmatmul.f32.gmra.mxu0 %v309
        %v416 = vpop.f32.mrf.mxu0
        %v417 = vadd.f32 %v392, %v416
        %418 = vmatmul.f32.gmra.mxu0 %v310
        %v419 = vpop.f32.mrf.mxu0
        %v420 = vadd.f32 %v392, %v419
        %421 = vmatmul.f32.gmra.mxu0 %v311
        %v422 = vpop.f32.mrf.mxu0
        %v423 = vadd.f32 %v392, %v422
        %424 = vmatmul.f32.gmra.mxu0 %v312
        %v425 = vpop.f32.mrf.mxu0
        %v426 = vadd.f32 %v392, %v425
        %427 = vmatmul.f32.gmra.mxu0 %v313
        %v428 = vpop.f32.mrf.mxu0
        %v429 = vadd.f32 %v392, %v428
        %430 = vmatmul.f32.gmra.mxu0 %v314
        %v431 = vpop.f32.mrf.mxu0
        %v432 = vadd.f32 %v392, %v431
        %433 = vmatmul.f32.gmra.mxu0 %v315
        %v434 = vpop.f32.mrf.mxu0
        %v435 = vadd.f32 %v392, %v434
        %436 = vmatmul.f32.gmra.mxu0 %v316
        %v437 = vpop.f32.mrf.mxu0
        %v438 = vadd.f32 %v392, %v437
        %439 = vmatmul.f32.gmra.mxu0 %v317
        %v440 = vpop.f32.mrf.mxu0
        %v441 = vadd.f32 %v392, %v440
        %442 = vmatmul.f32.gmra.mxu0 %v318
        %v443 = vpop.f32.mrf.mxu0
        %v444 = vadd.f32 %v392, %v443
        %445 = vmatmul.f32.gmra.mxu0 %v319
        %v446 = vpop.f32.mrf.mxu0
        %v447 = vadd.f32 %v392, %v446
        %448 = vmatmul.f32.gmra.mxu0 %v320
        %v449 = vpop.f32.mrf.mxu0
        %v450 = vadd.f32 %v392, %v449
        %451 = vmatmul.f32.gmra.mxu0 %v321
        %v452 = vpop.f32.mrf.mxu0
        %v453 = vadd.f32 %v392, %v452
        %454 = vmatmul.f32.gmra.mxu0 %v322
        %v455 = vpop.f32.mrf.mxu0
        %v456 = vadd.f32 %v392, %v455
        %457 = vmatmul.f32.gmra.mxu0 %v323
        %v458 = vpop.f32.mrf.mxu0
        %v459 = vadd.f32 %v392, %v458
        %460 = vdwg.mxu0
        %461 = vmatpush.msra.mxu0 %v355
        %462 = vmatpush.msra.mxu0 %v353
        %463 = vmatpush.msra.mxu0 %v351
        %464 = vmatpush.msra.mxu0 %v349
        %465 = vmatpush.msra.mxu0 %v347
        %466 = vmatpush.msra.mxu0 %v345
        %467 = vmatpush.msra.mxu0 %v343
        %468 = vmatpush.msra.mxu0 %v341
        %469 = vmatpush.msra.mxu0 %v339
        %470 = vmatpush.msra.mxu0 %v337
        %471 = vmatpush.msra.mxu0 %v335
        %472 = vmatpush.msra.mxu0 %v333
        %473 = vmatpush.msra.mxu0 %v331
        %474 = vmatpush.msra.mxu0 %v329
        %475 = vmatpush.msra.mxu0 %v327
        %476 = vmatpush.msra.mxu0 %v325
        %477 = vmatmul.f32.gmra.mxu0 %v308
        %v478 = vpop.f32.mrf.mxu0
        %v479 = vadd.f32 %v393, %v478
        %480 = vmatmul.f32.gmra.mxu0 %v309
        %v481 = vpop.f32.mrf.mxu0
        %v482 = vadd.f32 %v393, %v481
        %483 = vmatmul.f32.gmra.mxu0 %v310
        %v484 = vpop.f32.mrf.mxu0
        %v485 = vadd.f32 %v393, %v484
        %486 = vmatmul.f32.gmra.mxu0 %v311
        %v487 = vpop.f32.mrf.mxu0
        %v488 = vadd.f32 %v393, %v487
        %489 = vmatmul.f32.gmra.mxu0 %v312
        %v490 = vpop.f32.mrf.mxu0
        %v491 = vadd.f32 %v393, %v490
        %492 = vmatmul.f32.gmra.mxu0 %v313
        %v493 = vpop.f32.mrf.mxu0
        %v494 = vadd.f32 %v393, %v493
        %495 = vmatmul.f32.gmra.mxu0 %v314
        %v496 = vpop.f32.mrf.mxu0
        %v497 = vadd.f32 %v393, %v496
        %498 = vmatmul.f32.gmra.mxu0 %v315
        %v499 = vpop.f32.mrf.mxu0
        %v500 = vadd.f32 %v393, %v499
        %501 = vmatmul.f32.gmra.mxu0 %v316
        %v502 = vpop.f32.mrf.mxu0
        %v503 = vadd.f32 %v393, %v502
        %504 = vmatmul.f32.gmra.mxu0 %v317
        %v505 = vpop.f32.mrf.mxu0
        %v506 = vadd.f32 %v393, %v505
        %507 = vmatmul.f32.gmra.mxu0 %v318
        %v508 = vpop.f32.mrf.mxu0
        %v509 = vadd.f32 %v393, %v508
        %510 = vmatmul.f32.gmra.mxu0 %v319
        %v511 = vpop.f32.mrf.mxu0
        %v512 = vadd.f32 %v393, %v511
        %513 = vmatmul.f32.gmra.mxu0 %v320
        %v514 = vpop.f32.mrf.mxu0
        %v515 = vadd.f32 %v393, %v514
        %516 = vmatmul.f32.gmra.mxu0 %v321
        %v517 = vpop.f32.mrf.mxu0
        %v518 = vadd.f32 %v393, %v517
        %519 = vmatmul.f32.gmra.mxu0 %v322
        %v520 = vpop.f32.mrf.mxu0
        %v521 = vadd.f32 %v393, %v520
        %522 = vmatmul.f32.gmra.mxu0 %v323
        %v523 = vpop.f32.mrf.mxu0
        %v524 = vadd.f32 %v393, %v523
        %525 = vdwg.mxu0
        %v526 = vtanh.pop %v414
        %v527 = vtanh.pop %v479
        %v528 = vtanh.pop %v417
        %v529 = vtanh.pop %v482
        %v530 = vtanh.pop %v420
        %v531 = vtanh.pop %v485
        %v532 = vtanh.pop %v423
        %v533 = vtanh.pop %v488
        %v534 = vtanh.pop %v426
        %v535 = vtanh.pop %v491
        %v536 = vtanh.pop %v429
        %v537 = vtanh.pop %v494
        %v538 = vtanh.pop %v432
        %v539 = vtanh.pop %v497
        %v540 = vtanh.pop %v435
        %v541 = vtanh.pop %v500
        %v542 = vtanh.pop %v438
        %v543 = vtanh.pop %v503
        %v544 = vtanh.pop %v441
        %v545 = vtanh.pop %v506
        %v546 = vtanh.pop %v444
        %v547 = vtanh.pop %v509
        %v548 = vtanh.pop %v447
        %v549 = vtanh.pop %v512
        %v550 = vtanh.pop %v450
        %v551 = vtanh.pop %v515
        %v552 = vtanh.pop %v453
        %v553 = vtanh.pop %v518
        %v554 = vtanh.pop %v456
        %v555 = vtanh.pop %v521
        %v556 = vtanh.pop %v459
        %v557 = vtanh.pop %v524
        %v559 = vperm.slane %v389, 0
        %561 = vmatpush.msra.mxu0 %v372
        %562 = vmatpush.msra.mxu0 %v371
        %563 = vmatpush.msra.mxu0 %v370
        %564 = vmatpush.msra.mxu0 %v369
        %565 = vmatpush.msra.mxu0 %v368
        %566 = vmatpush.msra.mxu0 %v367
        %567 = vmatpush.msra.mxu0 %v366
        %568 = vmatpush.msra.mxu0 %v365
        %569 = vmatpush.msra.mxu0 %v364
        %570 = vmatpush.msra.mxu0 %v363
        %571 = vmatpush.msra.mxu0 %v362
        %572 = vmatpush.msra.mxu0 %v361
        %573 = vmatpush.msra.mxu0 %v360
        %574 = vmatpush.msra.mxu0 %v359
        %575 = vmatpush.msra.mxu0 %v358
        %576 = vmatpush.msra.mxu0 %v357
        %577 = vmatmul.f32.gmra.mxu0 %v526
        %v578 = vpop.f32.mrf.mxu0
        %v579 = vadd.f32 %v559, %v578
        %580 = vmatmul.f32.gmra.mxu0 %v528
        %v581 = vpop.f32.mrf.mxu0
        %v582 = vadd.f32 %v559, %v581
        %583 = vmatmul.f32.gmra.mxu0 %v530
        %v584 = vpop.f32.mrf.mxu0
        %v585 = vadd.f32 %v559, %v584
        %586 = vmatmul.f32.gmra.mxu0 %v532
        %v587 = vpop.f32.mrf.mxu0
        %v588 = vadd.f32 %v559, %v587
        %589 = vmatmul.f32.gmra.mxu0 %v534
        %v590 = vpop.f32.mrf.mxu0
        %v591 = vadd.f32 %v559, %v590
        %592 = vmatmul.f32.gmra.mxu0 %v536
        %v593 = vpop.f32.mrf.mxu0
        %v594 = vadd.f32 %v559, %v593
        %595 = vmatmul.f32.gmra.mxu0 %v538
        %v596 = vpop.f32.mrf.mxu0
        %v597 = vadd.f32 %v559, %v596
        %598 = vmatmul.f32.gmra.mxu0 %v540
        %v599 = vpop.f32.mrf.mxu0
        %v600 = vadd.f32 %v559, %v599
        %601 = vmatmul.f32.gmra.mxu0 %v542
        %v602 = vpop.f32.mrf.mxu0
        %v603 = vadd.f32 %v559, %v602
        %604 = vmatmul.f32.gmra.mxu0 %v544
        %v605 = vpop.f32.mrf.mxu0
        %v606 = vadd.f32 %v559, %v605
        %607 = vmatmul.f32.gmra.mxu0 %v546
        %v608 = vpop.f32.mrf.mxu0
        %v609 = vadd.f32 %v559, %v608
        %610 = vmatmul.f32.gmra.mxu0 %v548
        %v611 = vpop.f32.mrf.mxu0
        %v612 = vadd.f32 %v559, %v611
        %613 = vmatmul.f32.gmra.mxu0 %v550
        %v614 = vpop.f32.mrf.mxu0
        %v615 = vadd.f32 %v559, %v614
        %616 = vmatmul.f32.gmra.mxu0 %v552
        %v617 = vpop.f32.mrf.mxu0
        %v618 = vadd.f32 %v559, %v617
        %619 = vmatmul.f32.gmra.mxu0 %v554
        %v620 = vpop.f32.mrf.mxu0
        %v621 = vadd.f32 %v559, %v620
        %622 = vmatmul.f32.gmra.mxu0 %v556
        %v623 = vpop.f32.mrf.mxu0
        %v624 = vadd.f32 %v559, %v623
        %625 = vdwg.mxu0
        %626 = vmatpush.msra.mxu0 %v388
        %627 = vmatpush.msra.mxu0 %v387
        %628 = vmatpush.msra.mxu0 %v386
        %629 = vmatpush.msra.mxu0 %v385
        %630 = vmatpush.msra.mxu0 %v384
        %631 = vmatpush.msra.mxu0 %v383
        %632 = vmatpush.msra.mxu0 %v382
        %633 = vmatpush.msra.mxu0 %v381
        %634 = vmatpush.msra.mxu0 %v380
        %635 = vmatpush.msra.mxu0 %v379
        %636 = vmatpush.msra.mxu0 %v378
        %637 = vmatpush.msra.mxu0 %v377
        %638 = vmatpush.msra.mxu0 %v376
        %639 = vmatpush.msra.mxu0 %v375
        %640 = vmatpush.msra.mxu0 %v374
        %641 = vmatpush.msra.mxu0 %v373
        %642 = vmatmul.f32.gmra.mxu0 %v527
        %v643 = vpop.f32.mrf.mxu0
        %v644 = vadd.f32 %v579, %v643
        %645 = vmatmul.f32.gmra.mxu0 %v529
        %v646 = vpop.f32.mrf.mxu0
        %v647 = vadd.f32 %v582, %v646
        %648 = vmatmul.f32.gmra.mxu0 %v531
        %v649 = vpop.f32.mrf.mxu0
        %v650 = vadd.f32 %v585, %v649
        %651 = vmatmul.f32.gmra.mxu0 %v533
        %v652 = vpop.f32.mrf.mxu0
        %v653 = vadd.f32 %v588, %v652
        %654 = vmatmul.f32.gmra.mxu0 %v535
        %v655 = vpop.f32.mrf.mxu0
        %v656 = vadd.f32 %v591, %v655
        %657 = vmatmul.f32.gmra.mxu0 %v537
        %v658 = vpop.f32.mrf.mxu0
        %v659 = vadd.f32 %v594, %v658
        %660 = vmatmul.f32.gmra.mxu0 %v539
        %v661 = vpop.f32.mrf.mxu0
        %v662 = vadd.f32 %v597, %v661
        %663 = vmatmul.f32.gmra.mxu0 %v541
        %v664 = vpop.f32.mrf.mxu0
        %v665 = vadd.f32 %v600, %v664
        %666 = vmatmul.f32.gmra.mxu0 %v543
        %v667 = vpop.f32.mrf.mxu0
        %v668 = vadd.f32 %v603, %v667
        %669 = vmatmul.f32.gmra.mxu0 %v545
        %v670 = vpop.f32.mrf.mxu0
        %v671 = vadd.f32 %v606, %v670
        %672 = vmatmul.f32.gmra.mxu0 %v547
        %v673 = vpop.f32.mrf.mxu0
        %v674 = vadd.f32 %v609, %v673
        %675 = vmatmul.f32.gmra.mxu0 %v549
        %v676 = vpop.f32.mrf.mxu0
        %v677 = vadd.f32 %v612, %v676
        %678 = vmatmul.f32.gmra.mxu0 %v551
        %v679 = vpop.f32.mrf.mxu0
        %v680 = vadd.f32 %v615, %v679
        %681 = vmatmul.f32.gmra.mxu0 %v553
        %v682 = vpop.f32.mrf.mxu0
        %v683 = vadd.f32 %v618, %v682
        %684 = vmatmul.f32.gmra.mxu0 %v555
        %v685 = vpop.f32.mrf.mxu0
        %v686 = vadd.f32 %v621, %v685
        %687 = vmatmul.f32.gmra.mxu0 %v557
        %v688 = vpop.f32.mrf.mxu0
        %v689 = vadd.f32 %v624, %v688
        %690 = vdwg.mxu0
        %v691 = vstv %s390
        %v692 = vmul.f32 %v691, %v644
        %v693 = vmul.f32 %v691, %v647
        %v694 = vmul.f32 %v691, %v650
        %v695 = vmul.f32 %v691, %v653
        %v696 = vmul.f32 %v691, %v656
        %v697 = vmul.f32 %v691, %v659
        %v698 = vmul.f32 %v691, %v662
        %v699 = vmul.f32 %v691, %v665
        %v700 = vmul.f32 %v691, %v668
        %v701 = vmul.f32 %v691, %v671
        %v702 = vmul.f32 %v691, %v674
        %v703 = vmul.f32 %v691, %v677
        %v704 = vmul.f32 %v691, %v680
        %v705 = vmul.f32 %v691, %v683
        %v706 = vmul.f32 %v691, %v686
        %v707 = vmul.f32 %v691, %v689
        %v708 = vadd.f32 %v308, %v692
        %v709 = vadd.f32 %v309, %v693
        %v710 = vadd.f32 %v310, %v694
        %v711 = vadd.f32 %v311, %v695
        %v712 = vadd.f32 %v312, %v696
        %v713 = vadd.f32 %v313, %v697
        %v714 = vadd.f32 %v314, %v698
        %v715 = vadd.f32 %v315, %v699
        %v716 = vadd.f32 %v316, %v700
        %v717 = vadd.f32 %v317, %v701
        %v718 = vadd.f32 %v318, %v702
        %v719 = vadd.f32 %v319, %v703
        %v720 = vadd.f32 %v320, %v704
        %v721 = vadd.f32 %v321, %v705
        %v722 = vadd.f32 %v322, %v706
        %v723 = vadd.f32 %v323, %v707
        %724 = vst [vmem:[%s305] sm:$0xff] %v708
        %725 = vst [vmem:[%s305 + $0x8] sm:$0xff] %v709
        %726 = vst [vmem:[%s305 + $0x10] sm:$0xff] %v710
        %727 = vst [vmem:[%s305 + $0x18] sm:$0xff] %v711
        %728 = vst [vmem:[%s305 + $0x20] sm:$0xff] %v712
        %729 = vst [vmem:[%s305 + $0x28] sm:$0xff] %v713
        %730 = vst [vmem:[%s305 + $0x30] sm:$0xff] %v714
        %731 = vst [vmem:[%s305 + $0x38] sm:$0xff] %v715
        %732 = vst [vmem:[%s305 + $0x40] sm:$0xff] %v716
        %733 = vst [vmem:[%s305 + $0x48] sm:$0xff] %v717
        %734 = vst [vmem:[%s305 + $0x50] sm:$0xff] %v718
        %735 = vst [vmem:[%s305 + $0x58] sm:$0xff] %v719
        %736 = vst [vmem:[%s305 + $0x60] sm:$0xff] %v720
        %737 = vst [vmem:[%s305 + $0x68] sm:$0xff] %v721
        %738 = vst [vmem:[%s305 + $0x70] sm:$0xff] %v722
        %739 = vst [vmem:[%s305 + $0x78] sm:$0xff] %v723
        %s740 = sand.u32 %s164, 1
        %s741 = scalar_lea.sflag [#allocation5], %s740
        %s742 = sand.u32 %s164, 1
        %s743 = smul.addr %s742, 128
        %s744 = scalar_lea.vmem [#allocation9], %s743
        // Predicated region
        $region57: #{tpu_custom_call.1} parent=43 // pred_check
          %p745 = pneg %p174
        $region58: #{tpu_custom_call.1} parent=43 // pred_check_branch
          %747 = sbr.rel (%p745) target = $region60
        $region59: #{tpu_custom_call.1} parent=43 // pred_region
          %s748 = smul.u32 16, %s25
          %750 = vsyncadd %s741, 0
          %s751 = smul.addr %s748, 8
          %s752 = scalar_lea.hbm %s6, %s751
          %s753 = sshll.u32 %s744, 4
          %s754 = int_to_ptr.vmem [resolvable:$true] %s753
          %s755 = sshll.u32 %s752, 4
          %s756 = int_to_ptr.hbm [resolvable:$true] %s755
          %761 = dma.vmem_to_hbm [thread:$0]  %s754, 2048, %s756, %s741, 128, 128, 8
        $region60: #{tpu_custom_call.1} parent=43 // pred_fallthru
          _
      $region44: #{tpu_custom_call.1} parent=5 // pred_fallthru
        _
      %p762 = scmp.le.s32.totalorder 2, %s20
      // Predicated region
      $region61: #{tpu_custom_call.1} parent=5 // pred_check
        %p763 = pneg %p762
      $region62: #{tpu_custom_call.1} parent=5 // pred_check_branch
        %765 = sbr.rel (%p763) target = $region64
      $region63: #{tpu_custom_call.1} parent=5 // pred_region
        %s766 = ssub.s32 %s20, 2
        // Predicated region
        $region65: #{tpu_custom_call.1} parent=63 // pred_check
          %p767 = pneg %p180
        $region66: #{tpu_custom_call.1} parent=63 // pred_check_branch
          %769 = sbr.rel (%p767) target = $region68
        $region67: #{tpu_custom_call.1} parent=63 // pred_region
          %s770 = sand.u32 %s165, 1
          %s771 = scalar_lea.sflag [#allocation5], %s770
          %s772 = sand.u32 %s165, 1
          %s773 = smul.addr %s772, 128
          %s774 = scalar_lea.vmem [#allocation9], %s773
          %776 = dma.done %s771, 2048
        $region68: #{tpu_custom_call.1} parent=63 // pred_fallthru
          _
      $region64: #{tpu_custom_call.1} parent=5 // pred_fallthru
        _
    $region6: #{tpu_custom_call.1} parent=1 // loop_footer
      %s24 = sadd.s32 1, %s20
    $region7: #{tpu_custom_call.1} parent=1 // loop_footer_branch
      %19 = sbr.rel target = $region3
    $region8: #{tpu_custom_call.1} parent=1 // loop_exit
      _
    %777 = vsyncpa [#allocation4], 1
    %s778 = scalar_lea.sflag [#allocation4], 1
    %779 = vsyncpa %s778, 1
    %780 = vsyncpa [#allocation7], 1
    %781 = vsyncpa [#allocation5], 1
    %s782 = scalar_lea.sflag [#allocation5], 1
    %783 = vsyncpa %s782, 1

</llo_original>
